<compile_context>
chip_gen: v7x
topology: tpu7x:2x2x1
jax: 0.10.0
libtpu: 0.0.40
codegen_flags: <defaults>
</compile_context>

<pallas_src>
import jax
import jax.numpy as jnp
from jax.experimental import pallas as pl
from jax.experimental.pallas import tpu as pltpu


def _attn_kernel(feats_ref, w1_ref, b1_ref, w2_ref, out_ref):
    # feats_ref: (tn, T*F)   w1_ref: (T*F, T*H)   b1_ref: (1, T*H)
    # w2_ref:    (T*H, T)    out_ref: (tn, T)
    h = jnp.tanh(
        jnp.dot(feats_ref[...], w1_ref[...], preferred_element_type=jnp.float32)
        + b1_ref[...])                                           # (tn, T*H) lane-dense
    logits = jnp.dot(h, w2_ref[...], preferred_element_type=jnp.float32)  # (tn, T)

    # Numerically stable softmax over the temporal (lane) axis T.
    m = jnp.max(logits, axis=-1, keepdims=True)
    e = jnp.exp(logits - m)
    s = jnp.sum(e, axis=-1, keepdims=True)
    inv = pl.reciprocal(s, approx=True)          # EUP approx path (tanh owns the EUP budget)
    inv = inv * (2.0 - s * inv)                  # Newton step 1 (VPU only)
    inv = inv * (2.0 - s * inv)                  # Newton step 2 -> ~f32 accurate
    out_ref[...] = (e * inv).astype(out_ref.dtype)


def _round_up(x, m):
    return ((x + m - 1) // m) * m


def invariant_temporal_attention(vel_seq, his_seq, params, *, tile_n=2048):
    """vel_seq: (N, T, 3), his_seq: (N, T, in_dim) -> attention weights (N, T, 1)."""
    N, T, _ = vel_seq.shape
    w1 = params["w1"].astype(jnp.float32)                   # (F, H)
    b1 = params["b1"].astype(jnp.float32).reshape(1, -1)    # (1, H)
    w2 = params["w2"].astype(jnp.float32).reshape(-1, 1)    # (H, 1)
    # b2 dropped on purpose: softmax over T is shift-invariant, so the scalar
    # logit bias cancels exactly.
    F, H = w1.shape                                          # F = in_dim + 1

    # Pack features in XLA (cheap, fused): [speed | his], then a free
    # row-major reshape to the lane-dense 2-D slab (N, T*F).
    speed = jnp.sqrt(jnp.sum(jnp.square(vel_seq.astype(jnp.float32)),
                             axis=-1, keepdims=True))
    feats = jnp.concatenate([speed, his_seq.astype(jnp.float32)], axis=-1)
    feats2d = feats.reshape(N, T * F)

    # Block-diagonal weights: one dense matmul applies the per-timestep MLP to
    # all T timesteps at once with a fully lane-dense (tn, T*H) hidden layer.
    eye_t = jnp.eye(T, dtype=jnp.float32)
    w1_blk = jnp.kron(eye_t, w1)                             # (T*F, T*H)
    w2_blk = jnp.kron(eye_t, w2)                             # (T*H, T)
    b1_row = jnp.tile(b1, (1, T))                            # (1, T*H)

    # Node-axis tiling: tn multiple of 8 (sublane rule); at least 2 grid steps
    # whenever there is enough work so both v7x TensorCores are fed, and large
    # tiles to amortize per-grid-step pipeline overhead.
    tile_n = max(8, _round_up(int(tile_n), 8))
    steps = max(2 if N > 8 else 1, pl.cdiv(N, tile_n))
    tn = max(8, _round_up(pl.cdiv(N, steps), 8))
    n_pad = steps * tn
    if n_pad != N:
        feats2d = jnp.pad(feats2d, ((0, n_pad - N), (0, 0)))

    cost = pl.CostEstimate(
        flops=int(2 * n_pad * (T * F) * (T * H) + 2 * n_pad * (T * H) * T),
        transcendentals=int(n_pad * (T * H + T + 1)),
        bytes_accessed=int(4 * (n_pad * T * F + n_pad * T
                                + (T * F) * (T * H) + (T * H) * T + T * H)),
    )

    out2d = pl.pallas_call(
        _attn_kernel,
        out_shape=jax.ShapeDtypeStruct((n_pad, T), jnp.float32),
        grid=(steps,),
        in_specs=[
            pl.BlockSpec((tn, T * F), lambda i: (i, 0)),      # packed feats tile
            pl.BlockSpec((T * F, T * H), lambda i: (0, 0)),   # W1 block-diag (VMEM-resident)
            pl.BlockSpec((1, T * H), lambda i: (0, 0)),       # b1 tiled over T
            pl.BlockSpec((T * H, T), lambda i: (0, 0)),       # W2 block-diag
        ],
        out_specs=pl.BlockSpec((tn, T), lambda i: (i, 0)),
        compiler_params=pltpu.CompilerParams(
            dimension_semantics=("parallel",),                # megacore / 2 TCs on v7x
            vmem_limit_bytes=48 * 1024 * 1024,                # v7x-safe cap (64 MiB/TC)
        ),
        cost_estimate=cost,
    )(feats2d, w1_blk, b1_row, w2_blk)

    return out2d[:N].reshape(N, T, 1)


def init_params(key, in_dim, hidden_dim=32):
    """Deterministic synthetic init (stands in for the nn.Linear weights)."""
    k1, k2, k3, k4 = jax.random.split(key, 4)
    f = in_dim + 1
    scale1 = 1.0 / jnp.sqrt(f)
    scale2 = 1.0 / jnp.sqrt(hidden_dim)
    w1 = jax.random.uniform(k1, (f, hidden_dim), jnp.float32, -scale1, scale1)
    b1 = jax.random.uniform(k2, (1, hidden_dim), jnp.float32, -scale1, scale1)
    w2 = jax.random.uniform(k3, (1, hidden_dim), jnp.float32, -scale2, scale2)  # row layout
    b2 = jax.random.uniform(k4, (1, 1), jnp.float32, -scale2, scale2)
    return {"w1": w1, "b1": b1, "w2": w2, "b2": b2}


def _reference(vel_seq, his_seq, params):
    # Pure-JAX reference matching the PyTorch forward exactly (including b2).
    speed = jnp.linalg.norm(vel_seq, axis=-1, keepdims=True)
    feats = jnp.concatenate([speed, his_seq], axis=-1)
    h = jnp.tanh(feats @ params["w1"] + params["b1"][0])
    logits = h @ params["w2"].T + params["b2"][0]                # w2 stored as (1, H)
    return jax.nn.softmax(logits, axis=1)


def _check(N, T, in_dim, hidden, key, **kw):
    k_v, k_h, k_p = jax.random.split(key, 3)
    vel_seq = jax.random.normal(k_v, (N, T, 3), jnp.float32)
    his_seq = jax.random.normal(k_h, (N, T, in_dim), jnp.float32)
    params = init_params(k_p, in_dim, hidden)

    out = invariant_temporal_attention(vel_seq, his_seq, params, **kw)
    out = jax.block_until_ready(out)

    ref = _reference(vel_seq, his_seq, params)
    assert out.shape == (N, T, 1)
    assert jnp.allclose(out, ref, atol=1e-5, rtol=1e-5), "mismatch vs JAX reference"
    assert jnp.allclose(jnp.sum(out, axis=1), 1.0, atol=1e-5)


if __name__ == "__main__":
    key = jax.random.PRNGKey(0)
    k_small, k_big = jax.random.split(key, 2)

    # Small case (single block, full-extent tiles).
    _check(N=8, T=8, in_dim=4, hidden=32, key=k_small)

    # Larger, non-divisible N exercising the multi-step grid + padding path.
    _check(N=300, T=8, in_dim=4, hidden=32, key=k_big, tile_n=128)

    print("KERNEL_OK")
</pallas_src>

<mosaic_0001>
module attributes {stable_mosaic.version = 11 : i64} {
  func.func @_attn_kernel(%arg0: i32, %arg1: memref<8x40xf32, #tpu.memory_space<vmem>>, %arg2: memref<40x256xf32, #tpu.memory_space<vmem>>, %arg3: memref<1x256xf32, #tpu.memory_space<vmem>>, %arg4: memref<256x8xf32, #tpu.memory_space<vmem>>, %arg5: memref<8x8xf32, #tpu.memory_space<vmem>>) attributes {dimension_semantics = [#tpu.dimension_semantics<parallel>], iteration_bounds = array<i64: 1>, scalar_prefetch = 0 : i64, scratch_operands = 0 : i64, tpu.core_type = #tpu.core_type<tc>, window_params = [{transform_indices = @transform_0, window_bounds = array<i64: 8, 40>}, {pipeline_mode = #tpu.pipeline_mode<synchronous>, transform_indices = @transform_1, window_bounds = array<i64: 40, 256>}, {pipeline_mode = #tpu.pipeline_mode<synchronous>, transform_indices = @transform_2, window_bounds = array<i64: 1, 256>}, {pipeline_mode = #tpu.pipeline_mode<synchronous>, transform_indices = @transform_3, window_bounds = array<i64: 256, 8>}, {transform_indices = @transform_4, window_bounds = array<i64: 8, 8>}]} {
    %c0 = arith.constant 0 : index
    %c0_0 = arith.constant 0 : index
    %0 = vector.load %arg1[%c0, %c0_0] : memref<8x40xf32, #tpu.memory_space<vmem>>, vector<8x40xf32>
    %c0_1 = arith.constant 0 : index
    %c0_2 = arith.constant 0 : index
    %1 = vector.load %arg2[%c0_1, %c0_2] : memref<40x256xf32, #tpu.memory_space<vmem>>, vector<40x256xf32>
    %cst = arith.constant dense<0.000000e+00> : vector<8x256xf32>
    %2 = tpu.matmul %0, %1, %cst {dimension_numbers = #tpu.dot_dimension_numbers<[1], [0], [0], [1], [0, 0, 1, 1], [], []>} : vector<8x40xf32>, vector<40x256xf32>, vector<8x256xf32> -> vector<8x256xf32>
    %c0_3 = arith.constant 0 : index
    %c0_4 = arith.constant 0 : index
    %3 = vector.load %arg3[%c0_3, %c0_4] : memref<1x256xf32, #tpu.memory_space<vmem>>, vector<1x256xf32>
    %4 = vector.broadcast %3 : vector<1x256xf32> to vector<8x256xf32>
    %5 = arith.addf %2, %4 : vector<8x256xf32>
    %6 = math.tanh %5 : vector<8x256xf32>
    %c0_5 = arith.constant 0 : index
    %c0_6 = arith.constant 0 : index
    %7 = vector.load %arg4[%c0_5, %c0_6] : memref<256x8xf32, #tpu.memory_space<vmem>>, vector<256x8xf32>
    %cst_7 = arith.constant dense<0.000000e+00> : vector<8x8xf32>
    %8 = tpu.matmul %6, %7, %cst_7 {dimension_numbers = #tpu.dot_dimension_numbers<[1], [0], [0], [1], [0, 0, 1, 1], [], []>} : vector<8x256xf32>, vector<256x8xf32>, vector<8x8xf32> -> vector<8x8xf32>
    %cst_8 = arith.constant dense<0xFF800000> : vector<8xf32>
    %9 = vector.multi_reduction <maximumf>, %8, %cst_8 [1] : vector<8x8xf32> to vector<8xf32>
    %10 = vector.shape_cast %9 : vector<8xf32> to vector<8x1xf32>
    %11 = vector.broadcast %10 : vector<8x1xf32> to vector<8x8xf32>
    %12 = arith.subf %8, %11 : vector<8x8xf32>
    %13 = math.exp %12 : vector<8x8xf32>
    %cst_9 = arith.constant dense<0.000000e+00> : vector<8xf32>
    %14 = vector.multi_reduction <add>, %13, %cst_9 [1] : vector<8x8xf32> to vector<8xf32>
    %15 = vector.shape_cast %14 : vector<8xf32> to vector<8x1xf32>
    %16 = tpu.reciprocal %15 {approx = true} : vector<8x1xf32> -> vector<8x1xf32>
    %17 = arith.mulf %15, %16 : vector<8x1xf32>
    %cst_10 = arith.constant 2.000000e+00 : f32
    %18 = vector.broadcast %cst_10 : f32 to vector<8x1xf32>
    %19 = arith.subf %18, %17 : vector<8x1xf32>
    %20 = arith.mulf %16, %19 : vector<8x1xf32>
    %21 = arith.mulf %15, %20 : vector<8x1xf32>
    %cst_11 = arith.constant 2.000000e+00 : f32
    %22 = vector.broadcast %cst_11 : f32 to vector<8x1xf32>
    %23 = arith.subf %22, %21 : vector<8x1xf32>
    %24 = arith.mulf %20, %23 : vector<8x1xf32>
    %25 = vector.broadcast %24 : vector<8x1xf32> to vector<8x8xf32>
    %26 = arith.mulf %13, %25 : vector<8x8xf32>
    %c0_12 = arith.constant 0 : index
    %c0_13 = arith.constant 0 : index
    %27 = vector.load %arg5[%c0_12, %c0_13] : memref<8x8xf32, #tpu.memory_space<vmem>>, vector<8x8xf32>
    tpu.vector_store %arg5[%c0_12, %c0_13], %26 {strides = array<i32>} : memref<8x8xf32, #tpu.memory_space<vmem>>, vector<8x8xf32>,
    return
  }
  func.func @transform_0(%arg0: i32) -> (i32, i32) {
    %c0_i32 = arith.constant 0 : i32
    %c0_i32_0 = arith.constant 0 : i32
    return %arg0, %c0_i32 : i32, i32
  }
  func.func @transform_1(%arg0: i32) -> (i32, i32) {
    %c0_i32 = arith.constant 0 : i32
    %c0_i32_0 = arith.constant 0 : i32
    %c0_i32_1 = arith.constant 0 : i32
    return %c0_i32, %c0_i32_0 : i32, i32
  }
  func.func @transform_2(%arg0: i32) -> (i32, i32) {
    %c0_i32 = arith.constant 0 : i32
    %c0_i32_0 = arith.constant 0 : i32
    %c0_i32_1 = arith.constant 0 : i32
    return %c0_i32, %c0_i32_0 : i32, i32
  }
  func.func @transform_3(%arg0: i32) -> (i32, i32) {
    %c0_i32 = arith.constant 0 : i32
    %c0_i32_0 = arith.constant 0 : i32
    %c0_i32_1 = arith.constant 0 : i32
    return %c0_i32, %c0_i32_0 : i32, i32
  }
  func.func @transform_4(%arg0: i32) -> (i32, i32) {
    %c0_i32 = arith.constant 0 : i32
    %c0_i32_0 = arith.constant 0 : i32
    return %arg0, %c0_i32 : i32, i32
  }
}

</mosaic_0001>

<llo_original>
// kernel: tpu_custom_call.1
$region0: #{tpu_custom_call.1}
  #allocation0 [shape = 'u32[]', space=smem, size = 0x4, offset = 0x4, fixed_abs, tag = 'smem constant byte address 0x4 - core index']
  #allocation1 [shape = 'u32[144,128]{1,0:T(1,128)}', space=vmem, size = 0x12000, scoped, tag = 'internal scratch']
  %s0 = inlined_call_operand.vmem [shape: f32[8,40], index: 0, kind: input, shape index: {}]
  %s1 = inlined_call_operand.vmem [shape: f32[40,256], index: 1, kind: input, shape index: {}]
  %s2 = inlined_call_operand.vmem [shape: f32[1,256], index: 2, kind: input, shape index: {}]
  %s3 = inlined_call_operand.vmem [shape: f32[256,8], index: 3, kind: input, shape index: {}]
  %s4 = inlined_call_operand.hbm [shape: f32[8,8], index: 4, kind: output, shape index: {}]
  %s5 = sld [smem:[#allocation0]]
  $region26: #{tpu_custom_call.1} parent=0
    _
  %s7 = ssub.s32 1, %s5
  %s8 = scalar_select 0, %s7, %s5
  $region1: #{tpu_custom_call.1} parent=0
    #allocation2 [shape = 'u8[4096]{0}', space=vmem, size = 0x1000, scoped, tag = 'output window, operand 0, single buffered']
    #allocation3 [shape = 's32[1]{0}', space=sflag, size = 0x4, scoped, tag = 'scoped memory for tpu_custom_call.1']
    %9 = vsyncpa [#allocation3], 0
    // Predicated region
    $region2: #{tpu_custom_call.1} parent=1 // pred_check
      _
    $region3: #{tpu_custom_call.1} parent=1 // pred_check_branch
      %11 = sbr.rel (0) target = $region5
    $region4: #{tpu_custom_call.1} parent=1 // pred_region
      _
    $region5: #{tpu_custom_call.1} parent=1 // pred_fallthru
      _
    // Predicated region
    $region6: #{tpu_custom_call.1} parent=1 // pred_check
      _
    $region7: #{tpu_custom_call.1} parent=1 // pred_check_branch
      %13 = sbr.rel (0) target = $region9
    $region8: #{tpu_custom_call.1} parent=1 // pred_region
      _
    $region9: #{tpu_custom_call.1} parent=1 // pred_fallthru
      _
    // Predicated region
    $region10: #{tpu_custom_call.1} parent=1 // pred_check
      _
    $region11: #{tpu_custom_call.1} parent=1 // pred_check_branch
      %15 = sbr.rel (0) target = $region13
    $region12: #{tpu_custom_call.1} parent=1 // pred_region
      _
    $region13: #{tpu_custom_call.1} parent=1 // pred_fallthru
      _
    // Predicated region
    $region14: #{tpu_custom_call.1} parent=1 // pred_check
      _
    $region15: #{tpu_custom_call.1} parent=1 // pred_check_branch
      %17 = sbr.rel (0) target = $region17
    $region16: #{tpu_custom_call.1} parent=1 // pred_region
      _
    $region17: #{tpu_custom_call.1} parent=1 // pred_fallthru
      _
    %v18 = vld [vmem:[%s0] sm:$0xff]
    %v19 = vld [vmem:[%s1] sm:$0xff]
    %v20 = vld [vmem:[%s1 + $0x8] sm:$0xff]
    %v21 = vld [vmem:[%s1 + $0x10] sm:$0xff]
    %v22 = vld [vmem:[%s1 + $0x18] sm:$0xff]
    %v23 = vld [vmem:[%s1 + $0x20] sm:$0xff]
    %v24 = vld [vmem:[%s1 + $0x28] sm:$0xff]
    %v25 = vld [vmem:[%s1 + $0x30] sm:$0xff]
    %v26 = vld [vmem:[%s1 + $0x38] sm:$0xff]
    %v27 = vld [vmem:[%s1 + $0x40] sm:$0xff]
    %v28 = vld [vmem:[%s1 + $0x48] sm:$0xff]
    %v29 = vld [vmem:[%s2] sm:$0x3]
    %v31 = vlaneseq
    %v32 = vshrl.u32 %v31, 7
    %v33 = vsub.s32 0, %v32
    %v34 = vrot.slane %v29, %v33
    %v35 = vlaneseq
    %v36 = vshrl.u32 %v35, 7
    %v37 = vsub.s32 1, %v36
    %v38 = vrot.slane %v29, %v37
    %vm41 = vcmask 326656
    %v43 = vsel %vm41, %v18, 0
    %45 = vmatprep.subr.mxu0 %v20
    %46 = vmatpush1.msra.mxu0 %v19
    %47 = vmatprep.subr.mxu0 %v22
    %48 = vmatpush1.msra.mxu0 %v21
    %49 = vmatprep.subr.mxu0 %v24
    %50 = vmatpush1.msra.mxu0 %v23
    %51 = vmatprep.subr.mxu0 %v26
    %52 = vmatpush1.msra.mxu0 %v25
    %53 = vmatprep.subr.mxu0 %v28
    %54 = vmatpush1.msra.mxu0 %v27
    %55 = vmatprep.subr.mxu0 0.0
    %56 = vmatpush1.msra.mxu0 0.0
    %57 = vmatprep.subr.mxu0 0.0
    %58 = vmatpush1.msra.mxu0 0.0
    %59 = vmatprep.subr.mxu0 0.0
    %60 = vmatpush1.msra.mxu0 0.0
    %61 = vmatprep.subr.mxu0 0.0
    %62 = vmatpush1.msra.mxu0 0.0
    %63 = vmatprep.subr.mxu0 0.0
    %64 = vmatpush1.msra.mxu0 0.0
    %65 = vmatprep.subr.mxu0 0.0
    %66 = vmatpush1.msra.mxu0 0.0
    %67 = vmatprep.subr.mxu0 0.0
    %68 = vmatpush1.msra.mxu0 0.0
    %69 = vmatprep.subr.mxu0 0.0
    %70 = vmatpush1.msra.mxu0 0.0
    %71 = vmatprep.subr.mxu0 0.0
    %72 = vmatpush1.msra.mxu0 0.0
    %73 = vmatprep.subr.mxu0 0.0
    %74 = vmatpush1.msra.mxu0 0.0
    %75 = vmatprep.subr.mxu0 0.0
    %76 = vmatpush1.msra.mxu0 0.0
    %77 = vmatprep.subr.mxu0 0.0
    %78 = vmatpush1.msra.mxu0 0.0
    %79 = vmatprep.subr.mxu0 0.0
    %80 = vmatpush1.msra.mxu0 0.0
    %81 = vmatprep.subr.mxu0 0.0
    %82 = vmatpush1.msra.mxu0 0.0
    %83 = vmatprep.subr.mxu0 0.0
    %84 = vmatpush1.msra.mxu0 0.0
    %85 = vmatprep.subr.mxu0 0.0
    %86 = vmatpush1.msra.mxu0 0.0
    %87 = vmatprep.subr.mxu0 0.0
    %88 = vmatpush1.msra.mxu0 0.0
    %89 = vmatprep.subr.mxu0 0.0
    %90 = vmatpush1.msra.mxu0 0.0
    %91 = vmatprep.subr.mxu0 0.0
    %92 = vmatpush1.msra.mxu0 0.0
    %93 = vmatprep.subr.mxu0 0.0
    %94 = vmatpush1.msra.mxu0 0.0
    %95 = vmatprep.subr.mxu0 0.0
    %96 = vmatpush1.msra.mxu0 0.0
    %97 = vmatprep.subr.mxu0 0.0
    %98 = vmatpush1.msra.mxu0 0.0
    %99 = vmatprep.subr.mxu0 0.0
    %100 = vmatpush1.msra.mxu0 0.0
    %101 = vmatprep.subr.mxu0 0.0
    %102 = vmatpush1.msra.mxu0 0.0
    %103 = vmatprep.subr.mxu0 0.0
    %104 = vmatpush1.msra.mxu0 0.0
    %105 = vmatprep.subr.mxu0 0.0
    %106 = vmatpush1.msra.mxu0 0.0
    %107 = vmatprep.subr.mxu0 0.0
    %108 = vmatpush1.msra.mxu0 0.0
    %109 = vmatprep.mubr.f32.mxu0 0.0
    %110 = vmatmul.mubr.f32.gmra.mrb[0].mxu0 %v43
    %v111 = vpop.f32.mrb[0].mxu0
    %v112 = vadd.f32 %v34, %v111
    %v113 = vpop.f32.mrb[0].mxu0
    %v114 = vadd.f32 %v38, %v113
    %115 = vdwg.mxu0
    %v116 = vtanh.pop %v112
    %v117 = vtanh.pop %v114
    %v118 = vld [vmem:[%s3] sm:$0xff]
    %v119 = vld [vmem:[%s3 + $0x8] sm:$0xff]
    %v120 = vld [vmem:[%s3 + $0x10] sm:$0xff]
    %v121 = vld [vmem:[%s3 + $0x18] sm:$0xff]
    %v122 = vld [vmem:[%s3 + $0x20] sm:$0xff]
    %v123 = vld [vmem:[%s3 + $0x28] sm:$0xff]
    %v124 = vld [vmem:[%s3 + $0x30] sm:$0xff]
    %v125 = vld [vmem:[%s3 + $0x38] sm:$0xff]
    %v126 = vld [vmem:[%s3 + $0x40] sm:$0xff]
    %v127 = vld [vmem:[%s3 + $0x48] sm:$0xff]
    %v128 = vld [vmem:[%s3 + $0x50] sm:$0xff]
    %v129 = vld [vmem:[%s3 + $0x58] sm:$0xff]
    %v130 = vld [vmem:[%s3 + $0x60] sm:$0xff]
    %v131 = vld [vmem:[%s3 + $0x68] sm:$0xff]
    %v132 = vld [vmem:[%s3 + $0x70] sm:$0xff]
    %v133 = vld [vmem:[%s3 + $0x78] sm:$0xff]
    %v134 = vld [vmem:[%s3 + $0x80] sm:$0xff]
    %v135 = vld [vmem:[%s3 + $0x88] sm:$0xff]
    %v136 = vld [vmem:[%s3 + $0x90] sm:$0xff]
    %v137 = vld [vmem:[%s3 + $0x98] sm:$0xff]
    %v138 = vld [vmem:[%s3 + $0xa0] sm:$0xff]
    %v139 = vld [vmem:[%s3 + $0xa8] sm:$0xff]
    %v140 = vld [vmem:[%s3 + $0xb0] sm:$0xff]
    %v141 = vld [vmem:[%s3 + $0xb8] sm:$0xff]
    %v142 = vld [vmem:[%s3 + $0xc0] sm:$0xff]
    %v143 = vld [vmem:[%s3 + $0xc8] sm:$0xff]
    %v144 = vld [vmem:[%s3 + $0xd0] sm:$0xff]
    %v145 = vld [vmem:[%s3 + $0xd8] sm:$0xff]
    %v146 = vld [vmem:[%s3 + $0xe0] sm:$0xff]
    %v147 = vld [vmem:[%s3 + $0xe8] sm:$0xff]
    %v148 = vld [vmem:[%s3 + $0xf0] sm:$0xff]
    %v149 = vld [vmem:[%s3 + $0xf8] sm:$0xff]
    %150 = vmatprep.subr.mxu0 0.0
    %151 = vmatpush1.msra.mxu0 %v118
    %152 = vmatprep.subr.mxu0 0.0
    %153 = vmatpush1.msra.mxu0 %v119
    %154 = vmatprep.subr.mxu0 0.0
    %155 = vmatpush1.msra.mxu0 %v120
    %156 = vmatprep.subr.mxu0 0.0
    %157 = vmatpush1.msra.mxu0 %v121
    %158 = vmatprep.subr.mxu0 0.0
    %159 = vmatpush1.msra.mxu0 %v122
    %160 = vmatprep.subr.mxu0 0.0
    %161 = vmatpush1.msra.mxu0 %v123
    %162 = vmatprep.subr.mxu0 0.0
    %163 = vmatpush1.msra.mxu0 %v124
    %164 = vmatprep.subr.mxu0 0.0
    %165 = vmatpush1.msra.mxu0 %v125
    %166 = vmatprep.subr.mxu0 0.0
    %167 = vmatpush1.msra.mxu0 %v126
    %168 = vmatprep.subr.mxu0 0.0
    %169 = vmatpush1.msra.mxu0 %v127
    %170 = vmatprep.subr.mxu0 0.0
    %171 = vmatpush1.msra.mxu0 %v128
    %172 = vmatprep.subr.mxu0 0.0
    %173 = vmatpush1.msra.mxu0 %v129
    %174 = vmatprep.subr.mxu0 0.0
    %175 = vmatpush1.msra.mxu0 %v130
    %176 = vmatprep.subr.mxu0 0.0
    %177 = vmatpush1.msra.mxu0 %v131
    %178 = vmatprep.subr.mxu0 0.0
    %179 = vmatpush1.msra.mxu0 %v132
    %180 = vmatprep.subr.mxu0 0.0
    %181 = vmatpush1.msra.mxu0 %v133
    %182 = vmatprep.subr.mxu0 0.0
    %183 = vmatpush1.msra.mxu0 %v134
    %184 = vmatprep.subr.mxu0 0.0
    %185 = vmatpush1.msra.mxu0 %v135
    %186 = vmatprep.subr.mxu0 0.0
    %187 = vmatpush1.msra.mxu0 %v136
    %188 = vmatprep.subr.mxu0 0.0
    %189 = vmatpush1.msra.mxu0 %v137
    %190 = vmatprep.subr.mxu0 0.0
    %191 = vmatpush1.msra.mxu0 %v138
    %192 = vmatprep.subr.mxu0 0.0
    %193 = vmatpush1.msra.mxu0 %v139
    %194 = vmatprep.subr.mxu0 0.0
    %195 = vmatpush1.msra.mxu0 %v140
    %196 = vmatprep.subr.mxu0 0.0
    %197 = vmatpush1.msra.mxu0 %v141
    %198 = vmatprep.subr.mxu0 0.0
    %199 = vmatpush1.msra.mxu0 %v142
    %200 = vmatprep.subr.mxu0 0.0
    %201 = vmatpush1.msra.mxu0 %v143
    %202 = vmatprep.subr.mxu0 0.0
    %203 = vmatpush1.msra.mxu0 %v144
    %204 = vmatprep.subr.mxu0 0.0
    %205 = vmatpush1.msra.mxu0 %v145
    %206 = vmatprep.subr.mxu0 0.0
    %207 = vmatpush1.msra.mxu0 %v146
    %208 = vmatprep.subr.mxu0 0.0
    %209 = vmatpush1.msra.mxu0 %v147
    %210 = vmatprep.subr.mxu0 0.0
    %211 = vmatpush1.msra.mxu0 %v148
    %212 = vmatprep.subr.mxu0 0.0
    %213 = vmatpush1.msra.mxu0 %v149
    %214 = vmatprep.mubr.f32.mxu0 %v117
    %215 = vmatmul.mubr.f32.gmra.mrb[0].mxu0 %v116
    %v216 = vpop.f32.mrb[0].mxu0
    %v217 = vadd.f32 0.0, %v216
    %v218 = vpop.f32.mrb[0].mxu0
    %219 = vdwg.mxu0
    %vm220 = vcmask 64512
    %v221 = vsel %vm220, %v217, -inf
    %222 = vmax.xlane.f32.xlu0 %v221
    %v223 = vpop.xlane.xlu0 %222
    %v224 = vsub.f32 %v217, %v223
    %v225 = vmul.f32 %v224, 1.442695
    %v226 = vpow.pop %v225
    %v227 = vsel %vm220, %v226, 0.0
    %228 = vadd.xlane.f32.xlu0 %v227
    %v229 = vpop.xlane.xlu0 %228
    %v230 = vrcp.pop %v229
    %v231 = vmul.f32 %v229, %v230
    %v232 = vsub.f32 2.0, %v231
    %v233 = vmul.f32 %v230, %v232
    %v234 = vmul.f32 %v229, %v233
    %v235 = vsub.f32 2.0, %v234
    %v236 = vmul.f32 %v233, %v235
    %v237 = vmul.f32 %v226, %v236
    %238 = vst.msk [vmem:[#allocation2] sm:$0xff] %vm220, %v237
    // Predicated region
    $region18: #{tpu_custom_call.1} parent=1 // pred_check
      _
    $region19: #{tpu_custom_call.1} parent=1 // pred_check_branch
      %240 = sbr.rel (0) target = $region21
    $region20: #{tpu_custom_call.1} parent=1 // pred_region
      %s242 = ssub.s32 128, 128
      %243 = vsyncadd [#allocation3], %s242
      %s245 = sshll.u32 [#allocation2], 4
      %s246 = int_to_ptr.vmem [resolvable:$true] %s245
      %248 = dma.vmem_to_hbm [thread:$0]  %s246, 128, %s4, [#allocation3]
    $region21: #{tpu_custom_call.1} parent=1 // pred_fallthru
      _
    // Predicated region
    $region22: #{tpu_custom_call.1} parent=1 // pred_check
      _
    $region23: #{tpu_custom_call.1} parent=1 // pred_check_branch
      %250 = sbr.rel (0) target = $region25
    $region24: #{tpu_custom_call.1} parent=1 // pred_region
      %251 = dma.done [#allocation3], 128
    $region25: #{tpu_custom_call.1} parent=1 // pred_fallthru
      _
    %252 = vsyncpa [#allocation3], 1

</llo_original>
